<compile_context>
chip_gen: v5e
topology: v5e:2x2
jax: 0.10.0
libtpu: 0.0.40
codegen_flags: <defaults>
</compile_context>

<pallas_src>
import functools

import jax
import jax.numpy as jnp
from jax.experimental import pallas as pl
from jax.experimental.pallas import tpu as pltpu

IN_FEATURES = 28 * 28   # 784, as produced by nn.Flatten() on (B, 1, 28, 28)
LANE = 128
SUBLANE = 8


def _cdiv(a: int, b: int) -> int:
    return -(-a // b)


def _round_up(n: int, m: int) -> int:
    return ((n + m - 1) // m) * m


def _pad_dim(n: int) -> int:
    # Lane-dense; 256-wide N fills the v6e/v7x 2x256x256 MXU once H is "real".
    return LANE if n <= LANE else _round_up(n, 2 * LANE)


def _choose_batch_tile(batch: int, block_batch: int) -> int:
    n_target = max(1, _cdiv(batch, block_batch))
    if batch > 2 * SUBLANE:
        n_target = max(n_target, 2)   # >=2 tiles: v7x 2-TC sharding + DMA overlap
    return _round_up(_cdiv(batch, n_target), SUBLANE)


def _vmem_bytes(tb: int, h_pad: int, t_pad: int, weight_bytes: int) -> int:
    streamed = 2 * tb * IN_FEATURES * 4          # f32 x tile, double-buffered
    streamed += 2 * tb * (h_pad + t_pad) * 2     # bf16 act/logits tiles, double-buffered
    interm = tb * h_pad * (4 + 2 + 4 + 2)        # h1 f32 + bf16, h2 f32 + bf16
    return streamed + interm + weight_bytes


def mlp_kernel(x_ref, w1_ref, b1_ref, w2_ref, b2_ref, w3_ref, b3_ref,
               act_ref, logits_ref):
    # x streamed as f32 (single HBM read), cast to bf16 in VMEM for the MXU.
    x = x_ref[...].astype(jnp.bfloat16)

    # Block 1: Linear(784 -> H) + ReLU.  bf16 operands, f32 MXU accumulation.
    h1 = jnp.dot(x, w1_ref[...], preferred_element_type=jnp.float32)
    h1 = jnp.maximum(h1 + b1_ref[...], 0.0)

    # Block 2: Linear(H -> H) + Identity -> "activations".
    h2 = jnp.dot(h1.astype(jnp.bfloat16), w2_ref[...],
                 preferred_element_type=jnp.float32)
    h2 = h2 + b2_ref[...]
    act_ref[...] = h2.astype(act_ref.dtype)

    # Classifier: Linear(H -> T) -> "logits".
    lg = jnp.dot(h2.astype(jnp.bfloat16), w3_ref[...],
                 preferred_element_type=jnp.float32)
    logits_ref[...] = (lg + b3_ref[...]).astype(logits_ref.dtype)


@functools.partial(jax.jit, static_argnames=("block_batch",))
def mlp_forward(x, params, *, block_batch=512):
    """x: (B, 1, 28, 28) f32 NCHW.  Returns (activations (B,H), logits (B,T)) in f32."""
    w1, b1, w2, b2, w3, b3 = params
    B = x.shape[0]
    H = w1.shape[1]
    T = w3.shape[1]

    H_pad = _pad_dim(H)
    T_pad = _pad_dim(T)

    # Free metadata reshape; x stays f32 and is streamed by the kernel directly.
    x_flat = x.reshape(B, IN_FEATURES)

    def pad_cols(a, rows, cols, dtype):
        out = jnp.zeros((rows, cols), dtype)
        return out.at[:a.shape[0], :a.shape[1]].set(a.astype(dtype))

    # Weights/biases are tiny and read once; column-pad them lane-dense.
    w1_p = pad_cols(w1, IN_FEATURES, H_pad, jnp.bfloat16)
    w2_p = pad_cols(w2, H_pad, H_pad, jnp.bfloat16)
    w3_p = pad_cols(w3, H_pad, T_pad, jnp.bfloat16)
    b1_p = pad_cols(b1, 1, H_pad, jnp.float32)
    b2_p = pad_cols(b2, 1, H_pad, jnp.float32)
    b3_p = pad_cols(b3, 1, T_pad, jnp.float32)

    weight_bytes = ((w1_p.size + w2_p.size + w3_p.size) * 2
                    + (b1_p.size + b2_p.size + b3_p.size) * 4)

    budget = 44 * 1024 * 1024   # headroom under v7x's 64 MiB physical VMEM / TC
    if weight_bytes > budget:
        # TODO(synk): for H too large to keep all weights VMEM-resident on v7x,
        # switch to a (batch, n, k)-tiled grid with a VMEM f32 accumulator and
        # pl.when init/finalize instead of the resident-weight layout.
        raise NotImplementedError(
            f"hidden_size={H}: resident weights ({weight_bytes >> 20} MiB) "
            "exceed the VMEM budget of this kernel")

    TB = _choose_batch_tile(B, block_batch)
    while _vmem_bytes(TB, H_pad, T_pad, weight_bytes) > budget and TB > SUBLANE:
        TB = max(SUBLANE, _round_up(TB // 2, SUBLANE))
    n_tiles = _cdiv(B, TB)

    vmem_need = _vmem_bytes(TB, H_pad, T_pad, weight_bytes)
    vmem_limit = int(min(60 * 1024 * 1024,
                         max(32 * 1024 * 1024, int(vmem_need * 1.5))))

    def resident(shape):
        # Constant index_map -> stays in VMEM across the whole grid; single
        # buffer, since there is nothing to prefetch for it.
        return pl.BlockSpec(shape, lambda i: (0, 0), pipeline_mode=pl.Buffered(1))

    # Honest cost estimate: weights once, x at unpadded f32 size, outputs bf16.
    flops = 2 * n_tiles * TB * (IN_FEATURES * H_pad + H_pad * H_pad + H_pad * T_pad)
    bytes_accessed = (
        x_flat.size * 4
        + (w1_p.size + w2_p.size + w3_p.size) * 2
        + (b1_p.size + b2_p.size + b3_p.size) * 4
        + B * (H_pad + T_pad) * 2
    )

    act_p, logits_p = pl.pallas_call(
        mlp_kernel,
        out_shape=(
            jax.ShapeDtypeStruct((B, H_pad), jnp.bfloat16),
            jax.ShapeDtypeStruct((B, T_pad), jnp.bfloat16),
        ),
        grid=(n_tiles,),
        in_specs=[
            pl.BlockSpec((TB, IN_FEATURES), lambda i: (i, 0)),  # x: streamed f32 tile
            resident((IN_FEATURES, H_pad)),                     # w1
            resident((1, H_pad)),                               # b1
            resident((H_pad, H_pad)),                           # w2
            resident((1, H_pad)),                               # b2
            resident((H_pad, T_pad)),                           # w3
            resident((1, T_pad)),                               # b3
        ],
        out_specs=(
            pl.BlockSpec((TB, H_pad), lambda i: (i, 0)),        # activations tile
            pl.BlockSpec((TB, T_pad), lambda i: (i, 0)),        # logits tile
        ),
        compiler_params=pltpu.CompilerParams(
            dimension_semantics=("parallel",),
            vmem_limit_bytes=vmem_limit,
        ),
        cost_estimate=pl.CostEstimate(
            flops=flops, transcendentals=0, bytes_accessed=bytes_accessed),
    )(x_flat, w1_p, b1_p, w2_p, b2_p, w3_p, b3_p)

    # Slice away lane padding and upcast to the module's f32 output dtype.
    return act_p[:, :H].astype(jnp.float32), logits_p[:, :T].astype(jnp.float32)


def init_params(key, hidden_size, target_size):
    """Deterministic init matching PyTorch nn.Linear default U[-1/sqrt(fan_in), +1/sqrt(fan_in)]."""
    def linear(key, fan_in, fan_out):
        kw, kb = jax.random.split(key)
        bound = 1.0 / jnp.sqrt(fan_in)
        w = jax.random.uniform(kw, (fan_in, fan_out), jnp.float32, -bound, bound)
        b = jax.random.uniform(kb, (1, fan_out), jnp.float32, -bound, bound)
        return w, b

    k1, k2, k3 = jax.random.split(key, 3)
    w1, b1 = linear(k1, IN_FEATURES, hidden_size)
    w2, b2 = linear(k2, hidden_size, hidden_size)
    w3, b3 = linear(k3, hidden_size, target_size)
    return (w1, b1, w2, b2, w3, b3)


if __name__ == "__main__":
    hidden_size = 32
    target_size = 10
    batch = 2

    key = jax.random.PRNGKey(0)
    kx, kp = jax.random.split(key)

    # MNIST-like input, NCHW as in PyTorch.
    x = jax.random.normal(kx, (batch, 1, 28, 28), jnp.float32)
    params = init_params(kp, hidden_size, target_size)

    act, logits = mlp_forward(x, params)
    jax.block_until_ready((act, logits))

    assert act.shape == (batch, hidden_size) and logits.shape == (batch, target_size)
    assert act.dtype == jnp.float32 and logits.dtype == jnp.float32

    w1, b1, w2, b2, w3, b3 = params
    xf = x.reshape(batch, -1)

    # Reference 1: same bf16-operand / f32-accumulate / bf16-store recipe (tight).
    xb = xf.astype(jnp.bfloat16)
    h1 = jnp.maximum(
        jnp.dot(xb, w1.astype(jnp.bfloat16), preferred_element_type=jnp.float32) + b1, 0.0)
    h2 = jnp.dot(h1.astype(jnp.bfloat16), w2.astype(jnp.bfloat16),
                 preferred_element_type=jnp.float32) + b2
    lg = jnp.dot(h2.astype(jnp.bfloat16), w3.astype(jnp.bfloat16),
                 preferred_element_type=jnp.float32) + b3
    ref_act_t = h2.astype(jnp.bfloat16).astype(jnp.float32)
    ref_lg_t = lg.astype(jnp.bfloat16).astype(jnp.float32)
    assert jnp.allclose(act, ref_act_t, atol=2e-2, rtol=2e-2)
    assert jnp.allclose(logits, ref_lg_t, atol=2e-2, rtol=2e-2)

    # Reference 2: original full-f32 module semantics (loose, bf16 rounding slack).
    ref_act = jnp.maximum(xf @ w1 + b1, 0.0) @ w2 + b2
    ref_logits = ref_act @ w3 + b3
    assert jnp.allclose(act, ref_act, atol=6e-2, rtol=6e-2)
    assert jnp.allclose(logits, ref_logits, atol=6e-2, rtol=6e-2)

    print("KERNEL_OK")
</pallas_src>

<mosaic_0001>
module attributes {stable_mosaic.version = 11 : i64} {
  func.func @mlp_kernel(%arg0: i32, %arg1: memref<8x784xf32, #tpu.memory_space<vmem>>, %arg2: memref<784x128xbf16, #tpu.memory_space<vmem>>, %arg3: memref<1x128xf32, #tpu.memory_space<vmem>>, %arg4: memref<128x128xbf16, #tpu.memory_space<vmem>>, %arg5: memref<1x128xf32, #tpu.memory_space<vmem>>, %arg6: memref<128x128xbf16, #tpu.memory_space<vmem>>, %arg7: memref<1x128xf32, #tpu.memory_space<vmem>>, %arg8: memref<8x128xbf16, #tpu.memory_space<vmem>>, %arg9: memref<8x128xbf16, #tpu.memory_space<vmem>>) attributes {dimension_semantics = [#tpu.dimension_semantics<parallel>], iteration_bounds = array<i64: 1>, scalar_prefetch = 0 : i64, scratch_operands = 0 : i64, tpu.core_type = #tpu.core_type<tc>, window_params = [{transform_indices = @transform_0, window_bounds = array<i64: 8, 784>}, {pipeline_mode = #tpu.pipeline_mode<synchronous>, transform_indices = @transform_1, window_bounds = array<i64: 784, 128>}, {pipeline_mode = #tpu.pipeline_mode<synchronous>, transform_indices = @transform_2, window_bounds = array<i64: 1, 128>}, {pipeline_mode = #tpu.pipeline_mode<synchronous>, transform_indices = @transform_3, window_bounds = array<i64: 128, 128>}, {pipeline_mode = #tpu.pipeline_mode<synchronous>, transform_indices = @transform_4, window_bounds = array<i64: 1, 128>}, {pipeline_mode = #tpu.pipeline_mode<synchronous>, transform_indices = @transform_5, window_bounds = array<i64: 128, 128>}, {pipeline_mode = #tpu.pipeline_mode<synchronous>, transform_indices = @transform_6, window_bounds = array<i64: 1, 128>}, {transform_indices = @transform_7, window_bounds = array<i64: 8, 128>}, {transform_indices = @transform_8, window_bounds = array<i64: 8, 128>}]} {
    %c0 = arith.constant 0 : index
    %c0_0 = arith.constant 0 : index
    %0 = vector.load %arg1[%c0, %c0_0] : memref<8x784xf32, #tpu.memory_space<vmem>>, vector<8x784xf32>
    %1 = arith.truncf %0 : vector<8x784xf32> to vector<8x784xbf16>
    %c0_1 = arith.constant 0 : index
    %c0_2 = arith.constant 0 : index
    %2 = vector.load %arg2[%c0_1, %c0_2] : memref<784x128xbf16, #tpu.memory_space<vmem>>, vector<784x128xbf16>
    %cst = arith.constant dense<0.000000e+00> : vector<8x128xf32>
    %3 = tpu.matmul %1, %2, %cst {dimension_numbers = #tpu.dot_dimension_numbers<[1], [0], [0], [1], [0, 0, 1, 1], [], []>} : vector<8x784xbf16>, vector<784x128xbf16>, vector<8x128xf32> -> vector<8x128xf32>
    %c0_3 = arith.constant 0 : index
    %c0_4 = arith.constant 0 : index
    %4 = vector.load %arg3[%c0_3, %c0_4] : memref<1x128xf32, #tpu.memory_space<vmem>>, vector<1x128xf32>
    %5 = vector.broadcast %4 : vector<1x128xf32> to vector<8x128xf32>
    %6 = arith.addf %3, %5 : vector<8x128xf32>
    %cst_5 = arith.constant 0.000000e+00 : f32
    %7 = vector.broadcast %cst_5 : f32 to vector<8x128xf32>
    %8 = arith.maximumf %6, %7 : vector<8x128xf32>
    %9 = arith.truncf %8 : vector<8x128xf32> to vector<8x128xbf16>
    %c0_6 = arith.constant 0 : index
    %c0_7 = arith.constant 0 : index
    %10 = vector.load %arg4[%c0_6, %c0_7] : memref<128x128xbf16, #tpu.memory_space<vmem>>, vector<128x128xbf16>
    %cst_8 = arith.constant dense<0.000000e+00> : vector<8x128xf32>
    %11 = tpu.matmul %9, %10, %cst_8 {dimension_numbers = #tpu.dot_dimension_numbers<[1], [0], [0], [1], [0, 0, 1, 1], [], []>} : vector<8x128xbf16>, vector<128x128xbf16>, vector<8x128xf32> -> vector<8x128xf32>
    %c0_9 = arith.constant 0 : index
    %c0_10 = arith.constant 0 : index
    %12 = vector.load %arg5[%c0_9, %c0_10] : memref<1x128xf32, #tpu.memory_space<vmem>>, vector<1x128xf32>
    %13 = vector.broadcast %12 : vector<1x128xf32> to vector<8x128xf32>
    %14 = arith.addf %11, %13 : vector<8x128xf32>
    %15 = arith.truncf %14 : vector<8x128xf32> to vector<8x128xbf16>
    %c0_11 = arith.constant 0 : index
    %c0_12 = arith.constant 0 : index
    %16 = vector.load %arg8[%c0_11, %c0_12] : memref<8x128xbf16, #tpu.memory_space<vmem>>, vector<8x128xbf16>
    tpu.vector_store %arg8[%c0_11, %c0_12], %15 {strides = array<i32>} : memref<8x128xbf16, #tpu.memory_space<vmem>>, vector<8x128xbf16>,
    %17 = arith.truncf %14 : vector<8x128xf32> to vector<8x128xbf16>
    %c0_13 = arith.constant 0 : index
    %c0_14 = arith.constant 0 : index
    %18 = vector.load %arg6[%c0_13, %c0_14] : memref<128x128xbf16, #tpu.memory_space<vmem>>, vector<128x128xbf16>
    %cst_15 = arith.constant dense<0.000000e+00> : vector<8x128xf32>
    %19 = tpu.matmul %17, %18, %cst_15 {dimension_numbers = #tpu.dot_dimension_numbers<[1], [0], [0], [1], [0, 0, 1, 1], [], []>} : vector<8x128xbf16>, vector<128x128xbf16>, vector<8x128xf32> -> vector<8x128xf32>
    %c0_16 = arith.constant 0 : index
    %c0_17 = arith.constant 0 : index
    %20 = vector.load %arg7[%c0_16, %c0_17] : memref<1x128xf32, #tpu.memory_space<vmem>>, vector<1x128xf32>
    %21 = vector.broadcast %20 : vector<1x128xf32> to vector<8x128xf32>
    %22 = arith.addf %19, %21 : vector<8x128xf32>
    %23 = arith.truncf %22 : vector<8x128xf32> to vector<8x128xbf16>
    %c0_18 = arith.constant 0 : index
    %c0_19 = arith.constant 0 : index
    %24 = vector.load %arg9[%c0_18, %c0_19] : memref<8x128xbf16, #tpu.memory_space<vmem>>, vector<8x128xbf16>
    tpu.vector_store %arg9[%c0_18, %c0_19], %23 {strides = array<i32>} : memref<8x128xbf16, #tpu.memory_space<vmem>>, vector<8x128xbf16>,
    return
  }
  func.func @transform_0(%arg0: i32) -> (i32, i32) {
    %c0_i32 = arith.constant 0 : i32
    %c0_i32_0 = arith.constant 0 : i32
    return %arg0, %c0_i32 : i32, i32
  }
  func.func @transform_1(%arg0: i32) -> (i32, i32) {
    %c0_i32 = arith.constant 0 : i32
    %c0_i32_0 = arith.constant 0 : i32
    %c0_i32_1 = arith.constant 0 : i32
    return %c0_i32, %c0_i32_0 : i32, i32
  }
  func.func @transform_2(%arg0: i32) -> (i32, i32) {
    %c0_i32 = arith.constant 0 : i32
    %c0_i32_0 = arith.constant 0 : i32
    %c0_i32_1 = arith.constant 0 : i32
    return %c0_i32, %c0_i32_0 : i32, i32
  }
  func.func @transform_3(%arg0: i32) -> (i32, i32) {
    %c0_i32 = arith.constant 0 : i32
    %c0_i32_0 = arith.constant 0 : i32
    %c0_i32_1 = arith.constant 0 : i32
    return %c0_i32, %c0_i32_0 : i32, i32
  }
  func.func @transform_4(%arg0: i32) -> (i32, i32) {
    %c0_i32 = arith.constant 0 : i32
    %c0_i32_0 = arith.constant 0 : i32
    %c0_i32_1 = arith.constant 0 : i32
    return %c0_i32, %c0_i32_0 : i32, i32
  }
  func.func @transform_5(%arg0: i32) -> (i32, i32) {
    %c0_i32 = arith.constant 0 : i32
    %c0_i32_0 = arith.constant 0 : i32
    %c0_i32_1 = arith.constant 0 : i32
    return %c0_i32, %c0_i32_0 : i32, i32
  }
  func.func @transform_6(%arg0: i32) -> (i32, i32) {
    %c0_i32 = arith.constant 0 : i32
    %c0_i32_0 = arith.constant 0 : i32
    %c0_i32_1 = arith.constant 0 : i32
    return %c0_i32, %c0_i32_0 : i32, i32
  }
  func.func @transform_7(%arg0: i32) -> (i32, i32) {
    %c0_i32 = arith.constant 0 : i32
    %c0_i32_0 = arith.constant 0 : i32
    return %arg0, %c0_i32 : i32, i32
  }
  func.func @transform_8(%arg0: i32) -> (i32, i32) {
    %c0_i32 = arith.constant 0 : i32
    %c0_i32_0 = arith.constant 0 : i32
    return %arg0, %c0_i32 : i32, i32
  }
}

</mosaic_0001>

<llo_original>
// kernel: mlp_forward.1
$region0: #{mlp_forward.1}
  #allocation0 [shape = 'u32[]', space=smem, size = 0x4, offset = 0x4, fixed_abs, tag = 'smem constant byte address 0x4 - core index']
  #allocation1 [shape = 'u32[72,128]{1,0:T(1,128)}', space=vmem, size = 0x9000, scoped, tag = 'internal scratch']
  %s0 = inlined_call_operand.vmem [shape: f32[2,784], index: 0, kind: input, shape index: {}]
  %s1 = inlined_call_operand.vmem [shape: bf16[784,128], index: 1, kind: input, shape index: {}]
  %s2 = inlined_call_operand.vmem [shape: f32[1,128], index: 2, kind: input, shape index: {}]
  %s3 = inlined_call_operand.vmem [shape: bf16[128,128], index: 3, kind: input, shape index: {}]
  %s4 = inlined_call_operand.vmem [shape: f32[1,128], index: 4, kind: input, shape index: {}]
  %s5 = inlined_call_operand.vmem [shape: bf16[128,128], index: 5, kind: input, shape index: {}]
  %s6 = inlined_call_operand.vmem [shape: f32[1,128], index: 6, kind: input, shape index: {}]
  %s7 = inlined_call_operand.vmem [shape: bf16[2,128], index: 7, kind: output, shape index: {0}]
  %s8 = inlined_call_operand.vmem [shape: bf16[2,128], index: 8, kind: output, shape index: {1}]
  %9 = xla_tuple %s7, %s8
  %s10 = sld [smem:[#allocation0]]
  $region106: #{mlp_forward.1} parent=0
    _
  %s12 = ssub.s32 1, %s10
  %s13 = scalar_select 0, %s12, %s10
  $region1: #{mlp_forward.1} parent=0
    #allocation2 [shape = 'u8[2048]{0}', space=vmem, size = 0x800, scoped, tag = 'output window, operand 0, single buffered']
    #allocation3 [shape = 'u8[2048]{0}', space=vmem, size = 0x800, scoped, tag = 'output window, operand 1, single buffered']
    // Predicated region
    $region2: #{mlp_forward.1} parent=1 // pred_check
      _
    $region3: #{mlp_forward.1} parent=1 // pred_check_branch
      %15 = sbr.rel (0) target = $region5
    $region4: #{mlp_forward.1} parent=1 // pred_region
      _
    $region5: #{mlp_forward.1} parent=1 // pred_fallthru
      _
    // Predicated region
    $region6: #{mlp_forward.1} parent=1 // pred_check
      _
    $region7: #{mlp_forward.1} parent=1 // pred_check_branch
      %17 = sbr.rel (0) target = $region9
    $region8: #{mlp_forward.1} parent=1 // pred_region
      _
    $region9: #{mlp_forward.1} parent=1 // pred_fallthru
      _
    // Predicated region
    $region10: #{mlp_forward.1} parent=1 // pred_check
      _
    $region11: #{mlp_forward.1} parent=1 // pred_check_branch
      %19 = sbr.rel (0) target = $region13
    $region12: #{mlp_forward.1} parent=1 // pred_region
      _
    $region13: #{mlp_forward.1} parent=1 // pred_fallthru
      _
    // Predicated region
    $region14: #{mlp_forward.1} parent=1 // pred_check
      _
    $region15: #{mlp_forward.1} parent=1 // pred_check_branch
      %21 = sbr.rel (0) target = $region17
    $region16: #{mlp_forward.1} parent=1 // pred_region
      _
    $region17: #{mlp_forward.1} parent=1 // pred_fallthru
      _
    // Predicated region
    $region18: #{mlp_forward.1} parent=1 // pred_check
      _
    $region19: #{mlp_forward.1} parent=1 // pred_check_branch
      %23 = sbr.rel (0) target = $region21
    $region20: #{mlp_forward.1} parent=1 // pred_region
      _
    $region21: #{mlp_forward.1} parent=1 // pred_fallthru
      _
    // Predicated region
    $region22: #{mlp_forward.1} parent=1 // pred_check
      _
    $region23: #{mlp_forward.1} parent=1 // pred_check_branch
      %25 = sbr.rel (0) target = $region25
    $region24: #{mlp_forward.1} parent=1 // pred_region
      _
    $region25: #{mlp_forward.1} parent=1 // pred_fallthru
      _
    // Predicated region
    $region26: #{mlp_forward.1} parent=1 // pred_check
      _
    $region27: #{mlp_forward.1} parent=1 // pred_check_branch
      %27 = sbr.rel (0) target = $region29
    $region28: #{mlp_forward.1} parent=1 // pred_region
      _
    $region29: #{mlp_forward.1} parent=1 // pred_fallthru
      _
    %v29 = vld [vmem:[%s0] sm:$0xff]
    %v30 = vld [vmem:[%s0 + $0x8] sm:$0x3f]
    %v31 = vld [vmem:[%s0 + $0xe] sm:$0xff]
    %v32 = vld [vmem:[%s0 + $0x16] sm:$0x3f]
    %v33 = vld [vmem:[%s0 + $0x1c] sm:$0xff]
    %v34 = vld [vmem:[%s0 + $0x24] sm:$0x3f]
    %v35 = vld [vmem:[%s0 + $0x2a] sm:$0xff]
    %v36 = vld [vmem:[%s0 + $0x32] sm:$0x3f]
    %45 = vst [vmem:[#allocation1] ss:$4 sm:$0xff] %v29
    %s46 = scalar_lea.vmem [#allocation1], 1
    %47 = vst [vmem:[%s46] ss:$4 sm:$0xff] %v31
    %s48 = scalar_lea.vmem [#allocation1], 2
    %49 = vst [vmem:[%s48] ss:$4 sm:$0xff] %v33
    %s50 = scalar_lea.vmem [#allocation1], 3
    %51 = vst [vmem:[%s50] ss:$4 sm:$0xff] %v35
    %s52 = scalar_lea.vmem [#allocation1], 32
    %53 = vst [vmem:[%s52] ss:$4 sm:$0xff] %v30
    %s54 = scalar_lea.vmem [#allocation1], 33
    %55 = vst [vmem:[%s54] ss:$4 sm:$0xff] %v32
    %s56 = scalar_lea.vmem [#allocation1], 34
    %57 = vst [vmem:[%s56] ss:$4 sm:$0xff] %v34
    %s58 = scalar_lea.vmem [#allocation1], 35
    %59 = vst [vmem:[%s58] ss:$4 sm:$0xff] %v36
    %v60 = vld.sshfl [vmem:[#allocation1] sm:$0xff pattern:$0x73625140]
    %v61 = vld.sshfl [vmem:[#allocation1 + $0x8] sm:$0xff pattern:$0x73625140]
    %v62 = vld.sshfl [vmem:[#allocation1 + $0x10] sm:$0xff pattern:$0x73625140]
    %v63 = vld.sshfl [vmem:[#allocation1 + $0x18] sm:$0xff pattern:$0x73625140]
    %v64 = vld.sshfl [vmem:[#allocation1 + $0x20] sm:$0xff pattern:$0x73625140]
    %v65 = vld.sshfl [vmem:[#allocation1 + $0x28] sm:$0xff pattern:$0x73625140]
    %v66 = vld.sshfl [vmem:[#allocation1 + $0x30] sm:$0xff pattern:$0x73625140]
    %v74 = vpack.c.bf16 %v60, %v60
    %v75 = vpack.c.bf16 %v61, %v61
    %v76 = vpack.c.bf16 %v62, %v62
    %v77 = vpack.c.bf16 %v63, %v63
    %v78 = vpack.c.bf16 %v64, %v64
    %v79 = vpack.c.bf16 %v65, %v65
    %v80 = vpack.c.bf16 %v66, %v66
    %v81 = vld [vmem:[%s1] sm:$0xf]
    %v82 = vld [vmem:[%s1 + $0x4] sm:$0xf]
    %v83 = vld [vmem:[%s1 + $0x8] sm:$0xf]
    %v84 = vld [vmem:[%s1 + $0xc] sm:$0xf]
    %v85 = vld [vmem:[%s1 + $0x10] sm:$0xf]
    %v86 = vld [vmem:[%s1 + $0x14] sm:$0xf]
    %v87 = vld [vmem:[%s1 + $0x18] sm:$0xf]
    %v88 = vld [vmem:[%s1 + $0x1c] sm:$0xf]
    %v89 = vld [vmem:[%s1 + $0x20] sm:$0xf]
    %v90 = vld [vmem:[%s1 + $0x24] sm:$0xf]
    %v91 = vld [vmem:[%s1 + $0x28] sm:$0xf]
    %v92 = vld [vmem:[%s1 + $0x2c] sm:$0xf]
    %v93 = vld [vmem:[%s1 + $0x30] sm:$0xf]
    %v94 = vld [vmem:[%s1 + $0x34] sm:$0xf]
    %v95 = vld [vmem:[%s1 + $0x38] sm:$0xf]
    %v96 = vld [vmem:[%s1 + $0x3c] sm:$0xf]
    %v97 = vld [vmem:[%s1 + $0x40] sm:$0xf]
    %v98 = vld [vmem:[%s1 + $0x44] sm:$0xf]
    %v99 = vld [vmem:[%s1 + $0x48] sm:$0xf]
    %v100 = vld [vmem:[%s1 + $0x4c] sm:$0xf]
    %v101 = vld [vmem:[%s1 + $0x50] sm:$0xf]
    %v102 = vld [vmem:[%s1 + $0x54] sm:$0xf]
    %v103 = vld [vmem:[%s1 + $0x58] sm:$0xf]
    %v104 = vld [vmem:[%s1 + $0x5c] sm:$0xf]
    %v105 = vld [vmem:[%s1 + $0x60] sm:$0xf]
    %v106 = vld [vmem:[%s1 + $0x64] sm:$0xf]
    %v107 = vld [vmem:[%s1 + $0x68] sm:$0xf]
    %v108 = vld [vmem:[%s1 + $0x6c] sm:$0xf]
    %v109 = vld [vmem:[%s1 + $0x70] sm:$0xf]
    %v110 = vld [vmem:[%s1 + $0x74] sm:$0xf]
    %v111 = vld [vmem:[%s1 + $0x78] sm:$0xf]
    %v112 = vld [vmem:[%s1 + $0x7c] sm:$0xf]
    %v113 = vld [vmem:[%s1 + $0x80] sm:$0xf]
    %v114 = vld [vmem:[%s1 + $0x84] sm:$0xf]
    %v115 = vld [vmem:[%s1 + $0x88] sm:$0xf]
    %v116 = vld [vmem:[%s1 + $0x8c] sm:$0xf]
    %v117 = vld [vmem:[%s1 + $0x90] sm:$0xf]
    %v118 = vld [vmem:[%s1 + $0x94] sm:$0xf]
    %v119 = vld [vmem:[%s1 + $0x98] sm:$0xf]
    %v120 = vld [vmem:[%s1 + $0x9c] sm:$0xf]
    %v121 = vld [vmem:[%s1 + $0xa0] sm:$0xf]
    %v122 = vld [vmem:[%s1 + $0xa4] sm:$0xf]
    %v123 = vld [vmem:[%s1 + $0xa8] sm:$0xf]
    %v124 = vld [vmem:[%s1 + $0xac] sm:$0xf]
    %v125 = vld [vmem:[%s1 + $0xb0] sm:$0xf]
    %v126 = vld [vmem:[%s1 + $0xb4] sm:$0xf]
    %v127 = vld [vmem:[%s1 + $0xb8] sm:$0xf]
    %v128 = vld [vmem:[%s1 + $0xbc] sm:$0xf]
    %v129 = vld [vmem:[%s1 + $0xc0] sm:$0xf]
    %v130 = vld [vmem:[%s1 + $0xc4] sm:$0xf]
    %v131 = vld [vmem:[%s1 + $0xc8] sm:$0xf]
    %v132 = vld [vmem:[%s1 + $0xcc] sm:$0xf]
    %v133 = vld [vmem:[%s1 + $0xd0] sm:$0xf]
    %v134 = vld [vmem:[%s1 + $0xd4] sm:$0xf]
    %v135 = vld [vmem:[%s1 + $0xd8] sm:$0xf]
    %v136 = vld [vmem:[%s1 + $0xdc] sm:$0xf]
    %v137 = vld [vmem:[%s1 + $0xe0] sm:$0xf]
    %v138 = vld [vmem:[%s1 + $0xe4] sm:$0xf]
    %v139 = vld [vmem:[%s1 + $0xe8] sm:$0xf]
    %v140 = vld [vmem:[%s1 + $0xec] sm:$0xf]
    %v141 = vld [vmem:[%s1 + $0xf0] sm:$0xf]
    %v142 = vld [vmem:[%s1 + $0xf4] sm:$0xf]
    %v143 = vld [vmem:[%s1 + $0xf8] sm:$0xf]
    %v144 = vld [vmem:[%s1 + $0xfc] sm:$0xf]
    %v145 = vld [vmem:[%s1 + $0x100] sm:$0xf]
    %v146 = vld [vmem:[%s1 + $0x104] sm:$0xf]
    %v147 = vld [vmem:[%s1 + $0x108] sm:$0xf]
    %v148 = vld [vmem:[%s1 + $0x10c] sm:$0xf]
    %v149 = vld [vmem:[%s1 + $0x110] sm:$0xf]
    %v150 = vld [vmem:[%s1 + $0x114] sm:$0xf]
    %v151 = vld [vmem:[%s1 + $0x118] sm:$0xf]
    %v152 = vld [vmem:[%s1 + $0x11c] sm:$0xf]
    %v153 = vld [vmem:[%s1 + $0x120] sm:$0xf]
    %v154 = vld [vmem:[%s1 + $0x124] sm:$0xf]
    %v155 = vld [vmem:[%s1 + $0x128] sm:$0xf]
    %v156 = vld [vmem:[%s1 + $0x12c] sm:$0xf]
    %v157 = vld [vmem:[%s1 + $0x130] sm:$0xf]
    %v158 = vld [vmem:[%s1 + $0x134] sm:$0xf]
    %v159 = vld [vmem:[%s1 + $0x138] sm:$0xf]
    %v160 = vld [vmem:[%s1 + $0x13c] sm:$0xf]
    %v161 = vld [vmem:[%s1 + $0x140] sm:$0xf]
    %v162 = vld [vmem:[%s1 + $0x144] sm:$0xf]
    %v163 = vld [vmem:[%s1 + $0x148] sm:$0xf]
    %v164 = vld [vmem:[%s1 + $0x14c] sm:$0xf]
    %v165 = vld [vmem:[%s1 + $0x150] sm:$0xf]
    %v166 = vld [vmem:[%s1 + $0x154] sm:$0xf]
    %v167 = vld [vmem:[%s1 + $0x158] sm:$0xf]
    %v168 = vld [vmem:[%s1 + $0x15c] sm:$0xf]
    %v169 = vld [vmem:[%s1 + $0x160] sm:$0xf]
    %v170 = vld [vmem:[%s1 + $0x164] sm:$0xf]
    %v171 = vld [vmem:[%s1 + $0x168] sm:$0xf]
    %v172 = vld [vmem:[%s1 + $0x16c] sm:$0xf]
    %v173 = vld [vmem:[%s1 + $0x170] sm:$0xf]
    %v174 = vld [vmem:[%s1 + $0x174] sm:$0xf]
    %v175 = vld [vmem:[%s1 + $0x178] sm:$0xf]
    %v176 = vld [vmem:[%s1 + $0x17c] sm:$0xf]
    %v177 = vld [vmem:[%s1 + $0x180] sm:$0xf]
    %v178 = vld [vmem:[%s1 + $0x184] sm:$0xf]
    %v179 = vld [vmem:[%s2] sm:$0x1]
    %v181 = vperm.slane %v179, 0
    %v281 = vunpack.c.l.b16 %v81
    %v282 = vunpack.c.l.b16 %v82
    %v283 = vunpack.c.l.b16 %v83
    %v284 = vunpack.c.l.b16 %v84
    %v285 = vunpack.c.l.b16 %v85
    %v286 = vunpack.c.l.b16 %v86
    %v287 = vunpack.c.l.b16 %v87
    %v288 = vunpack.c.l.b16 %v88
    %v289 = vunpack.c.l.b16 %v89
    %v290 = vunpack.c.l.b16 %v90
    %v291 = vunpack.c.l.b16 %v91
    %v292 = vunpack.c.l.b16 %v92
    %v293 = vunpack.c.l.b16 %v93
    %v294 = vunpack.c.l.b16 %v94
    %v295 = vunpack.c.l.b16 %v95
    %v296 = vunpack.c.l.b16 %v96
    %v297 = vunpack.c.l.b16 %v97
    %v298 = vunpack.c.l.b16 %v98
    %v299 = vunpack.c.l.b16 %v99
    %v300 = vunpack.c.l.b16 %v100
    %v301 = vunpack.c.l.b16 %v101
    %v302 = vunpack.c.l.b16 %v102
    %v303 = vunpack.c.l.b16 %v103
    %v304 = vunpack.c.l.b16 %v104
    %v305 = vunpack.c.l.b16 %v105
    %v306 = vunpack.c.l.b16 %v106
    %v307 = vunpack.c.l.b16 %v107
    %v308 = vunpack.c.l.b16 %v108
    %v309 = vunpack.c.l.b16 %v109
    %v310 = vunpack.c.l.b16 %v110
    %v311 = vunpack.c.l.b16 %v111
    %v312 = vunpack.c.l.b16 %v112
    %v313 = vunpack.c.l.b16 %v113
    %v314 = vunpack.c.l.b16 %v114
    %v315 = vunpack.c.l.b16 %v115
    %v316 = vunpack.c.l.b16 %v116
    %v317 = vunpack.c.l.b16 %v117
    %v318 = vunpack.c.l.b16 %v118
    %v319 = vunpack.c.l.b16 %v119
    %v320 = vunpack.c.l.b16 %v120
    %v321 = vunpack.c.l.b16 %v121
    %v322 = vunpack.c.l.b16 %v122
    %v323 = vunpack.c.l.b16 %v123
    %v324 = vunpack.c.l.b16 %v124
    %v325 = vunpack.c.l.b16 %v125
    %v326 = vunpack.c.l.b16 %v126
    %v327 = vunpack.c.l.b16 %v127
    %v328 = vunpack.c.l.b16 %v128
    %v329 = vunpack.c.l.b16 %v129
    %v330 = vunpack.c.l.b16 %v130
    %v331 = vunpack.c.l.b16 %v131
    %v332 = vunpack.c.l.b16 %v132
    %v333 = vunpack.c.l.b16 %v133
    %v334 = vunpack.c.l.b16 %v134
    %v335 = vunpack.c.l.b16 %v135
    %v336 = vunpack.c.l.b16 %v136
    %v337 = vunpack.c.l.b16 %v137
    %v338 = vunpack.c.l.b16 %v138
    %v339 = vunpack.c.l.b16 %v139
    %v340 = vunpack.c.l.b16 %v140
    %v341 = vunpack.c.l.b16 %v141
    %v342 = vunpack.c.l.b16 %v142
    %v343 = vunpack.c.l.b16 %v143
    %v344 = vunpack.c.l.b16 %v144
    %v345 = vunpack.c.l.b16 %v145
    %v346 = vunpack.c.l.b16 %v146
    %v347 = vunpack.c.l.b16 %v147
    %v348 = vunpack.c.l.b16 %v148
    %v349 = vunpack.c.l.b16 %v149
    %v350 = vunpack.c.l.b16 %v150
    %v351 = vunpack.c.l.b16 %v151
    %v352 = vunpack.c.l.b16 %v152
    %v353 = vunpack.c.l.b16 %v153
    %v354 = vunpack.c.l.b16 %v154
    %v355 = vunpack.c.l.b16 %v155
    %v356 = vunpack.c.l.b16 %v156
    %v357 = vunpack.c.l.b16 %v157
    %v358 = vunpack.c.l.b16 %v158
    %v359 = vunpack.c.l.b16 %v159
    %v360 = vunpack.c.l.b16 %v160
    %v361 = vunpack.c.l.b16 %v161
    %v362 = vunpack.c.l.b16 %v162
    %v363 = vunpack.c.l.b16 %v163
    %v364 = vunpack.c.l.b16 %v164
    %v365 = vunpack.c.l.b16 %v165
    %v366 = vunpack.c.l.b16 %v166
    %v367 = vunpack.c.l.b16 %v167
    %v368 = vunpack.c.l.b16 %v168
    %v369 = vunpack.c.l.b16 %v169
    %v370 = vunpack.c.l.b16 %v170
    %v371 = vunpack.c.l.b16 %v171
    %v372 = vunpack.c.l.b16 %v172
    %v373 = vunpack.c.l.b16 %v173
    %v374 = vunpack.c.l.b16 %v174
    %v375 = vunpack.c.l.b16 %v175
    %v376 = vunpack.c.l.b16 %v176
    %v377 = vunpack.c.l.b16 %v177
    %v378 = vunpack.c.l.b16 %v178
    %v379 = vpack.c.b16 %v282, %v281
    %v380 = vpack.c.b16 %v284, %v283
    %v381 = vpack.c.b16 %v286, %v285
    %v382 = vpack.c.b16 %v288, %v287
    %v383 = vpack.c.b16 %v290, %v289
    %v384 = vpack.c.b16 %v292, %v291
    %v385 = vpack.c.b16 %v294, %v293
    %v386 = vpack.c.b16 %v296, %v295
    %v387 = vpack.c.b16 %v298, %v297
    %v388 = vpack.c.b16 %v300, %v299
    %v389 = vpack.c.b16 %v302, %v301
    %v390 = vpack.c.b16 %v304, %v303
    %v391 = vpack.c.b16 %v306, %v305
    %v392 = vpack.c.b16 %v308, %v307
    %v393 = vpack.c.b16 %v310, %v309
    %v394 = vpack.c.b16 %v312, %v311
    %v395 = vpack.c.b16 %v314, %v313
    %v396 = vpack.c.b16 %v316, %v315
    %v397 = vpack.c.b16 %v318, %v317
    %v398 = vpack.c.b16 %v320, %v319
    %v399 = vpack.c.b16 %v322, %v321
    %v400 = vpack.c.b16 %v324, %v323
    %v401 = vpack.c.b16 %v326, %v325
    %v402 = vpack.c.b16 %v328, %v327
    %v403 = vpack.c.b16 %v330, %v329
    %v404 = vpack.c.b16 %v332, %v331
    %v405 = vpack.c.b16 %v334, %v333
    %v406 = vpack.c.b16 %v336, %v335
    %v407 = vpack.c.b16 %v338, %v337
    %v408 = vpack.c.b16 %v340, %v339
    %v409 = vpack.c.b16 %v342, %v341
    %v410 = vpack.c.b16 %v344, %v343
    %v411 = vpack.c.b16 %v346, %v345
    %v412 = vpack.c.b16 %v348, %v347
    %v413 = vpack.c.b16 %v350, %v349
    %v414 = vpack.c.b16 %v352, %v351
    %v415 = vpack.c.b16 %v354, %v353
    %v416 = vpack.c.b16 %v356, %v355
    %v417 = vpack.c.b16 %v358, %v357
    %v418 = vpack.c.b16 %v360, %v359
    %v419 = vpack.c.b16 %v362, %v361
    %v420 = vpack.c.b16 %v364, %v363
    %v421 = vpack.c.b16 %v366, %v365
    %v422 = vpack.c.b16 %v368, %v367
    %v423 = vpack.c.b16 %v370, %v369
    %v424 = vpack.c.b16 %v372, %v371
    %v425 = vpack.c.b16 %v374, %v373
    %v426 = vpack.c.b16 %v376, %v375
    %v427 = vpack.c.b16 %v378, %v377
    %vm477 = vcmask 130048
    %v479 = vsel %vm477, %v80, 0
    %481 = vmatpush.bf16.msra.mxu0 %v386
    %482 = vmatpush.bf16.msra.mxu0 %v385
    %483 = vmatpush.bf16.msra.mxu0 %v384
    %484 = vmatpush.bf16.msra.mxu0 %v383
    %485 = vmatpush.bf16.msra.mxu0 %v382
    %486 = vmatpush.bf16.msra.mxu0 %v381
    %487 = vmatpush.bf16.msra.mxu0 %v380
    %488 = vmatpush.bf16.msra.mxu0 %v379
    %489 = vmatmul.bf16.gmra.mxu0 %v74
    %v490 = vpop.f32.mrf.mxu0
    %v491 = vadd.f32 %v181, %v490
    %v492 = vpop.f32.mrf.mxu0
    %493 = vdwg.mxu0
    %494 = vmatpush.bf16.msra.mxu0 %v394
    %495 = vmatpush.bf16.msra.mxu0 %v393
    %496 = vmatpush.bf16.msra.mxu0 %v392
    %497 = vmatpush.bf16.msra.mxu0 %v391
    %498 = vmatpush.bf16.msra.mxu0 %v390
    %499 = vmatpush.bf16.msra.mxu0 %v389
    %500 = vmatpush.bf16.msra.mxu0 %v388
    %501 = vmatpush.bf16.msra.mxu0 %v387
    %502 = vmatmul.bf16.gmra.mxu0 %v75
    %v503 = vpop.f32.mrf.mxu0
    %v504 = vadd.f32 %v491, %v503
    %v505 = vpop.f32.mrf.mxu0
    %506 = vdwg.mxu0
    %507 = vmatpush.bf16.msra.mxu0 %v402
    %508 = vmatpush.bf16.msra.mxu0 %v401
    %509 = vmatpush.bf16.msra.mxu0 %v400
    %510 = vmatpush.bf16.msra.mxu0 %v399
    %511 = vmatpush.bf16.msra.mxu0 %v398
    %512 = vmatpush.bf16.msra.mxu0 %v397
    %513 = vmatpush.bf16.msra.mxu0 %v396
    %514 = vmatpush.bf16.msra.mxu0 %v395
    %515 = vmatmul.bf16.gmra.mxu0 %v76
    %v516 = vpop.f32.mrf.mxu0
    %v517 = vadd.f32 %v504, %v516
    %v518 = vpop.f32.mrf.mxu0
    %519 = vdwg.mxu0
    %520 = vmatpush.bf16.msra.mxu0 %v410
    %521 = vmatpush.bf16.msra.mxu0 %v409
    %522 = vmatpush.bf16.msra.mxu0 %v408
    %523 = vmatpush.bf16.msra.mxu0 %v407
    %524 = vmatpush.bf16.msra.mxu0 %v406
    %525 = vmatpush.bf16.msra.mxu0 %v405
    %526 = vmatpush.bf16.msra.mxu0 %v404
    %527 = vmatpush.bf16.msra.mxu0 %v403
    %528 = vmatmul.bf16.gmra.mxu0 %v77
    %v529 = vpop.f32.mrf.mxu0
    %v530 = vadd.f32 %v517, %v529
    %v531 = vpop.f32.mrf.mxu0
    %532 = vdwg.mxu0
    %533 = vmatpush.bf16.msra.mxu0 %v418
    %534 = vmatpush.bf16.msra.mxu0 %v417
    %535 = vmatpush.bf16.msra.mxu0 %v416
    %536 = vmatpush.bf16.msra.mxu0 %v415
    %537 = vmatpush.bf16.msra.mxu0 %v414
    %538 = vmatpush.bf16.msra.mxu0 %v413
    %539 = vmatpush.bf16.msra.mxu0 %v412
    %540 = vmatpush.bf16.msra.mxu0 %v411
    %541 = vmatmul.bf16.gmra.mxu0 %v78
    %v542 = vpop.f32.mrf.mxu0
    %v543 = vadd.f32 %v530, %v542
    %v544 = vpop.f32.mrf.mxu0
    %545 = vdwg.mxu0
    %546 = vmatpush.bf16.msra.mxu0 %v426
    %547 = vmatpush.bf16.msra.mxu0 %v425
    %548 = vmatpush.bf16.msra.mxu0 %v424
    %549 = vmatpush.bf16.msra.mxu0 %v423
    %550 = vmatpush.bf16.msra.mxu0 %v422
    %551 = vmatpush.bf16.msra.mxu0 %v421
    %552 = vmatpush.bf16.msra.mxu0 %v420
    %553 = vmatpush.bf16.msra.mxu0 %v419
    %554 = vmatmul.bf16.gmra.mxu0 %v79
    %v555 = vpop.f32.mrf.mxu0
    %v556 = vadd.f32 %v543, %v555
    %v557 = vpop.f32.mrf.mxu0
    %558 = vdwg.mxu0
    %559 = vmatpush.bf16.msra.mxu0 0
    %560 = vmatpush.bf16.msra.mxu0 0
    %561 = vmatpush.bf16.msra.mxu0 0
    %562 = vmatpush.bf16.msra.mxu0 0
    %563 = vmatpush.bf16.msra.mxu0 0
    %564 = vmatpush.bf16.msra.mxu0 0
    %565 = vmatpush.bf16.msra.mxu0 0
    %566 = vmatpush.bf16.msra.mxu0 %v427
    %567 = vmatmul.bf16.gmra.mxu0 %v479
    %v568 = vpop.f32.mrf.mxu0
    %v569 = vadd.f32 %v556, %v568
    %v570 = vpop.f32.mrf.mxu0
    %571 = vdwg.mxu0
    %v572 = vmax.f32 %v569, 0.0
    %v573 = vpack.c.bf16 %v572, %v572
    %v574 = vld [vmem:[%s3] sm:$0xf]
    %v575 = vld [vmem:[%s3 + $0x4] sm:$0xf]
    %v576 = vld [vmem:[%s3 + $0x8] sm:$0xf]
    %v577 = vld [vmem:[%s3 + $0xc] sm:$0xf]
    %v578 = vld [vmem:[%s3 + $0x10] sm:$0xf]
    %v579 = vld [vmem:[%s3 + $0x14] sm:$0xf]
    %v580 = vld [vmem:[%s3 + $0x18] sm:$0xf]
    %v581 = vld [vmem:[%s3 + $0x1c] sm:$0xf]
    %v582 = vld [vmem:[%s3 + $0x20] sm:$0xf]
    %v583 = vld [vmem:[%s3 + $0x24] sm:$0xf]
    %v584 = vld [vmem:[%s3 + $0x28] sm:$0xf]
    %v585 = vld [vmem:[%s3 + $0x2c] sm:$0xf]
    %v586 = vld [vmem:[%s3 + $0x30] sm:$0xf]
    %v587 = vld [vmem:[%s3 + $0x34] sm:$0xf]
    %v588 = vld [vmem:[%s3 + $0x38] sm:$0xf]
    %v589 = vld [vmem:[%s3 + $0x3c] sm:$0xf]
    %v590 = vld [vmem:[%s4] sm:$0x1]
    %v592 = vperm.slane %v590, 0
    %v610 = vunpack.c.l.b16 %v574
    %v611 = vunpack.c.l.b16 %v575
    %v612 = vunpack.c.l.b16 %v576
    %v613 = vunpack.c.l.b16 %v577
    %v614 = vunpack.c.l.b16 %v578
    %v615 = vunpack.c.l.b16 %v579
    %v616 = vunpack.c.l.b16 %v580
    %v617 = vunpack.c.l.b16 %v581
    %v618 = vunpack.c.l.b16 %v582
    %v619 = vunpack.c.l.b16 %v583
    %v620 = vunpack.c.l.b16 %v584
    %v621 = vunpack.c.l.b16 %v585
    %v622 = vunpack.c.l.b16 %v586
    %v623 = vunpack.c.l.b16 %v587
    %v624 = vunpack.c.l.b16 %v588
    %v625 = vunpack.c.l.b16 %v589
    %v626 = vpack.c.b16 %v611, %v610
    %v627 = vpack.c.b16 %v613, %v612
    %v628 = vpack.c.b16 %v615, %v614
    %v629 = vpack.c.b16 %v617, %v616
    %v630 = vpack.c.b16 %v619, %v618
    %v631 = vpack.c.b16 %v621, %v620
    %v632 = vpack.c.b16 %v623, %v622
    %v633 = vpack.c.b16 %v625, %v624
    %642 = vmatpush.bf16.msra.mxu0 %v633
    %643 = vmatpush.bf16.msra.mxu0 %v632
    %644 = vmatpush.bf16.msra.mxu0 %v631
    %645 = vmatpush.bf16.msra.mxu0 %v630
    %646 = vmatpush.bf16.msra.mxu0 %v629
    %647 = vmatpush.bf16.msra.mxu0 %v628
    %648 = vmatpush.bf16.msra.mxu0 %v627
    %649 = vmatpush.bf16.msra.mxu0 %v626
    %650 = vmatmul.bf16.gmra.mxu0 %v573
    %v651 = vpop.f32.mrf.mxu0
    %v652 = vadd.f32 %v592, %v651
    %v653 = vpop.f32.mrf.mxu0
    %654 = vdwg.mxu0
    %v655 = vpack.c.bf16 %v652, %v652
    %v657 = vrot.slane %v655, 3
    %vm658 = vcmask 1040384
    %v661 = vsel %vm658, %v655, %v657
    %vm662 = vcmask 1041409
    %v663 = vsel %vm662, %v655, %v657
    %v665 = vrot.slane %v663, 1
    %vm666 = vcmask 1042434
    %v667 = vsel %vm666, %v655, %v657
    %v669 = vrot.slane %v667, 2
    %vm670 = vcmask 1043459
    %v671 = vsel %vm670, %v655, %v657
    %v673 = vrot.slane %v671, 3
    %678 = vst [vmem:[#allocation2] sm:$0x1] %v661
    %679 = vst [vmem:[#allocation2 + $0x1] sm:$0x1] %v665
    %680 = vst [vmem:[#allocation2 + $0x2] sm:$0x1] %v669
    %681 = vst [vmem:[#allocation2 + $0x3] sm:$0x1] %v673
    %v682 = vld [vmem:[%s5] sm:$0xf]
    %v683 = vld [vmem:[%s5 + $0x4] sm:$0xf]
    %v684 = vld [vmem:[%s5 + $0x8] sm:$0xf]
    %v685 = vld [vmem:[%s5 + $0xc] sm:$0xf]
    %v686 = vld [vmem:[%s5 + $0x10] sm:$0xf]
    %v687 = vld [vmem:[%s5 + $0x14] sm:$0xf]
    %v688 = vld [vmem:[%s5 + $0x18] sm:$0xf]
    %v689 = vld [vmem:[%s5 + $0x1c] sm:$0xf]
    %v690 = vld [vmem:[%s5 + $0x20] sm:$0xf]
    %v691 = vld [vmem:[%s5 + $0x24] sm:$0xf]
    %v692 = vld [vmem:[%s5 + $0x28] sm:$0xf]
    %v693 = vld [vmem:[%s5 + $0x2c] sm:$0xf]
    %v694 = vld [vmem:[%s5 + $0x30] sm:$0xf]
    %v695 = vld [vmem:[%s5 + $0x34] sm:$0xf]
    %v696 = vld [vmem:[%s5 + $0x38] sm:$0xf]
    %v697 = vld [vmem:[%s5 + $0x3c] sm:$0xf]
    %v698 = vld [vmem:[%s6] sm:$0x1]
    %v700 = vperm.slane %v698, 0
    %v718 = vunpack.c.l.b16 %v682
    %v719 = vunpack.c.l.b16 %v683
    %v720 = vunpack.c.l.b16 %v684
    %v721 = vunpack.c.l.b16 %v685
    %v722 = vunpack.c.l.b16 %v686
    %v723 = vunpack.c.l.b16 %v687
    %v724 = vunpack.c.l.b16 %v688
    %v725 = vunpack.c.l.b16 %v689
    %v726 = vunpack.c.l.b16 %v690
    %v727 = vunpack.c.l.b16 %v691
    %v728 = vunpack.c.l.b16 %v692
    %v729 = vunpack.c.l.b16 %v693
    %v730 = vunpack.c.l.b16 %v694
    %v731 = vunpack.c.l.b16 %v695
    %v732 = vunpack.c.l.b16 %v696
    %v733 = vunpack.c.l.b16 %v697
    %v734 = vpack.c.b16 %v719, %v718
    %v735 = vpack.c.b16 %v721, %v720
    %v736 = vpack.c.b16 %v723, %v722
    %v737 = vpack.c.b16 %v725, %v724
    %v738 = vpack.c.b16 %v727, %v726
    %v739 = vpack.c.b16 %v729, %v728
    %v740 = vpack.c.b16 %v731, %v730
    %v741 = vpack.c.b16 %v733, %v732
    %750 = vmatpush.bf16.msra.mxu0 %v741
    %751 = vmatpush.bf16.msra.mxu0 %v740
    %752 = vmatpush.bf16.msra.mxu0 %v739
    %753 = vmatpush.bf16.msra.mxu0 %v738
    %754 = vmatpush.bf16.msra.mxu0 %v737
    %755 = vmatpush.bf16.msra.mxu0 %v736
    %756 = vmatpush.bf16.msra.mxu0 %v735
    %757 = vmatpush.bf16.msra.mxu0 %v734
    %758 = vmatmul.bf16.gmra.mxu0 %v655
    %v759 = vpop.f32.mrf.mxu0
    %v760 = vadd.f32 %v700, %v759
    %v761 = vpop.f32.mrf.mxu0
    %762 = vdwg.mxu0
    %v763 = vpack.c.bf16 %v760, %v760
    %v765 = vrot.slane %v763, 3
    %v768 = vsel %vm658, %v763, %v765
    %v769 = vsel %vm662, %v763, %v765
    %v771 = vrot.slane %v769, 1
    %v772 = vsel %vm666, %v763, %v765
    %v774 = vrot.slane %v772, 2
    %v775 = vsel %vm670, %v763, %v765
    %v777 = vrot.slane %v775, 3
    %782 = vst [vmem:[#allocation3] sm:$0x1] %v768
    %783 = vst [vmem:[#allocation3 + $0x1] sm:$0x1] %v771
    %784 = vst [vmem:[#allocation3 + $0x2] sm:$0x1] %v774
    %785 = vst [vmem:[#allocation3 + $0x3] sm:$0x1] %v777
    // Predicated region
    $region30: #{mlp_forward.1} parent=1 // pred_check
      _
    $region31: #{mlp_forward.1} parent=1 // pred_check_branch
      %787 = sbr.rel (0) target = $region33
    $region32: #{mlp_forward.1} parent=1 // pred_region
      // Predicated region
      $region34: #{mlp_forward.1} parent=32 // pred_check
        _
      $region35: #{mlp_forward.1} parent=32 // pred_check_branch
        %789 = sbr.rel (0) target = $region37
      $region36: #{mlp_forward.1} parent=32 // pred_region
        // Predicated region
        $region38: #{mlp_forward.1} parent=36 // pred_check
          _
        $region39: #{mlp_forward.1} parent=36 // pred_check_branch
          %791 = sbr.rel target = $region41
        $region40: #{mlp_forward.1} parent=36 // pred_region
          // Predicated region
          $region53: #{mlp_forward.1} parent=40 // pred_check
            _
          $region54: #{mlp_forward.1} parent=40 // pred_check_branch
            %807 = sbr.rel (0) target = $region56
          $region55: #{mlp_forward.1} parent=40 // pred_region
            %s809 = ssub.s32 2, 1
            loop: start=0, step=1, limit=1
            $region57: #{mlp_forward.1} parent=55 // loop_pre_header
              _
            $region58: #{mlp_forward.1} parent=55 // loop_header
              %s811 = sphi 0, %s815
              %p812 = scmp.ge.s32.totalorder %s811, 1
              %s816 = sphi [#allocation2], [#allocation2]
              %s817 = sphi %s7, %s7
            $region59: #{mlp_forward.1} parent=55 // loop_header_branch
              %814 = sbr.rel (%p812) target = $region63
            $region60: #{mlp_forward.1} parent=55 // loop_body
              %v818 = vld [vmem:[%s816] sm:%s809]
              %819 = vst [vmem:[%s817] sm:%s809] %v818
            $region61: #{mlp_forward.1} parent=55 // loop_footer
              %s815 = sadd.s32 1, %s811
            $region62: #{mlp_forward.1} parent=55 // loop_footer_branch
              %810 = sbr.rel target = $region58
            $region63: #{mlp_forward.1} parent=55 // loop_exit
              _
          $region56: #{mlp_forward.1} parent=40 // pred_fallthru
            _
        $region41: #{mlp_forward.1} parent=36 // pred_fallthru
          _
        // Predicated region
        $region42: #{mlp_forward.1} parent=36 // pred_check
          _
        $region43: #{mlp_forward.1} parent=36 // pred_check_branch
          %793 = sbr.rel (0) target = $region45
        $region44: #{mlp_forward.1} parent=36 // pred_region
          %s795 = ssub.s32 2, 1
          loop: start=0, step=1, limit=1
          $region46: #{mlp_forward.1} parent=44 // loop_pre_header
            _
          $region47: #{mlp_forward.1} parent=44 // loop_header
            %s797 = sphi 0, %s801
            %p798 = scmp.ge.s32.totalorder %s797, 1
            %s802 = sphi [#allocation2], [#allocation2]
            %s803 = sphi %s7, %s7
          $region48: #{mlp_forward.1} parent=44 // loop_header_branch
            %800 = sbr.rel (%p798) target = $region52
          $region49: #{mlp_forward.1} parent=44 // loop_body
            %v804 = vld [vmem:[%s802] sm:%s795]
            %805 = vst [vmem:[%s803] sm:%s795] %v804
          $region50: #{mlp_forward.1} parent=44 // loop_footer
            %s801 = sadd.s32 1, %s797
          $region51: #{mlp_forward.1} parent=44 // loop_footer_branch
            %796 = sbr.rel target = $region47
          $region52: #{mlp_forward.1} parent=44 // loop_exit
            _
        $region45: #{mlp_forward.1} parent=36 // pred_fallthru
          _
      $region37: #{mlp_forward.1} parent=32 // pred_fallthru
        _
      %820 = vnop
    $region33: #{mlp_forward.1} parent=1 // pred_fallthru
      _
    // Predicated region
    $region64: #{mlp_forward.1} parent=1 // pred_check
      _
    $region65: #{mlp_forward.1} parent=1 // pred_check_branch
      %822 = sbr.rel (0) target = $region67
    $region66: #{mlp_forward.1} parent=1 // pred_region
      // Predicated region
      $region68: #{mlp_forward.1} parent=66 // pred_check
        _
      $region69: #{mlp_forward.1} parent=66 // pred_check_branch
        %824 = sbr.rel (0) target = $region71
      $region70: #{mlp_forward.1} parent=66 // pred_region
        // Predicated region
        $region72: #{mlp_forward.1} parent=70 // pred_check
          _
        $region73: #{mlp_forward.1} parent=70 // pred_check_branch
          %826 = sbr.rel target = $region75
        $region74: #{mlp_forward.1} parent=70 // pred_region
          // Predicated region
          $region87: #{mlp_forward.1} parent=74 // pred_check
            _
          $region88: #{mlp_forward.1} parent=74 // pred_check_branch
            %842 = sbr.rel (0) target = $region90
          $region89: #{mlp_forward.1} parent=74 // pred_region
            %s844 = ssub.s32 2, 1
            loop: start=0, step=1, limit=1
            $region91: #{mlp_forward.1} parent=89 // loop_pre_header
              _
            $region92: #{mlp_forward.1} parent=89 // loop_header
              %s846 = sphi 0, %s850
              %p847 = scmp.ge.s32.totalorder %s846, 1
              %s851 = sphi [#allocation3], [#allocation3]
              %s852 = sphi %s8, %s8
            $region93: #{mlp_forward.1} parent=89 // loop_header_branch
              %849 = sbr.rel (%p847) target = $region97
            $region94: #{mlp_forward.1} parent=89 // loop_body
              %v853 = vld [vmem:[%s851] sm:%s844]
              %854 = vst [vmem:[%s852] sm:%s844] %v853
            $region95: #{mlp_forward.1} parent=89 // loop_footer
              %s850 = sadd.s32 1, %s846
            $region96: #{mlp_forward.1} parent=89 // loop_footer_branch
              %845 = sbr.rel target = $region92
            $region97: #{mlp_forward.1} parent=89 // loop_exit
              _
          $region90: #{mlp_forward.1} parent=74 // pred_fallthru
            _
        $region75: #{mlp_forward.1} parent=70 // pred_fallthru
          _
        // Predicated region
        $region76: #{mlp_forward.1} parent=70 // pred_check
          _
        $region77: #{mlp_forward.1} parent=70 // pred_check_branch
          %828 = sbr.rel (0) target = $region79
        $region78: #{mlp_forward.1} parent=70 // pred_region
          %s830 = ssub.s32 2, 1
          loop: start=0, step=1, limit=1
          $region80: #{mlp_forward.1} parent=78 // loop_pre_header
            _
          $region81: #{mlp_forward.1} parent=78 // loop_header
            %s832 = sphi 0, %s836
            %p833 = scmp.ge.s32.totalorder %s832, 1
            %s837 = sphi [#allocation3], [#allocation3]
            %s838 = sphi %s8, %s8
          $region82: #{mlp_forward.1} parent=78 // loop_header_branch
            %835 = sbr.rel (%p833) target = $region86
          $region83: #{mlp_forward.1} parent=78 // loop_body
            %v839 = vld [vmem:[%s837] sm:%s830]
            %840 = vst [vmem:[%s838] sm:%s830] %v839
          $region84: #{mlp_forward.1} parent=78 // loop_footer
            %s836 = sadd.s32 1, %s832
          $region85: #{mlp_forward.1} parent=78 // loop_footer_branch
            %831 = sbr.rel target = $region81
          $region86: #{mlp_forward.1} parent=78 // loop_exit
            _
        $region79: #{mlp_forward.1} parent=70 // pred_fallthru
          _
      $region71: #{mlp_forward.1} parent=66 // pred_fallthru
        _
      %855 = vnop
    $region67: #{mlp_forward.1} parent=1 // pred_fallthru
      _
    // Predicated region
    $region98: #{mlp_forward.1} parent=1 // pred_check
      _
    $region99: #{mlp_forward.1} parent=1 // pred_check_branch
      %857 = sbr.rel (0) target = $region101
    $region100: #{mlp_forward.1} parent=1 // pred_region
      _
    $region101: #{mlp_forward.1} parent=1 // pred_fallthru
      _
    // Predicated region
    $region102: #{mlp_forward.1} parent=1 // pred_check
      _
    $region103: #{mlp_forward.1} parent=1 // pred_check_branch
      %859 = sbr.rel (0) target = $region105
    $region104: #{mlp_forward.1} parent=1 // pred_region
      _
    $region105: #{mlp_forward.1} parent=1 // pred_fallthru
      _

</llo_original>
